<compile_context>
chip_gen: v7x
topology: tpu7x:2x2x1
jax: 0.10.0
libtpu: 0.0.40
codegen_flags: <defaults>
</compile_context>

<pallas_src>
import math

import jax
import jax.numpy as jnp
from jax import lax
from jax.experimental import pallas as pl
from jax.experimental.pallas import tpu as pltpu


# ---------------------------------------------------------------------------
# tiling helpers (respect the (8, 128) block rule)
# ---------------------------------------------------------------------------
def _tile_sublane(dim, cap):
    """Largest divisor of `dim` that is <= cap and a multiple of 8 (else full dim)."""
    if dim <= cap:
        return dim
    t = (cap // 8) * 8
    while t >= 8:
        if dim % t == 0:
            return t
        t -= 8
    return dim


def _tile_lane(dim, cap):
    """Largest divisor of `dim` that is <= cap and a multiple of 128 (else full dim)."""
    if dim <= cap:
        return dim
    t = (cap // 128) * 128
    while t >= 128:
        if dim % t == 0:
            return t
        t -= 128
    return dim


# ---------------------------------------------------------------------------
# LayerNormalization kernel (torch spec: unbiased std, scalar alpha/bias)
# ---------------------------------------------------------------------------
def _make_layernorm_kernel(eps, d):
    def kernel(x_ref, a_ref, b_ref, o_ref):
        x = x_ref[...].astype(jnp.float32)
        mean = jnp.mean(x, axis=-1, keepdims=True)
        centered = x - mean
        var = jnp.sum(centered * centered, axis=-1, keepdims=True) * (1.0 / (d - 1))
        std = jnp.sqrt(var)
        y = a_ref[0] * centered / (std + eps) + b_ref[0]
        o_ref[...] = y.astype(o_ref.dtype)

    return kernel


def layernorm(x2d, alpha, bias, *, eps=1e-6, tm_cap=256):
    """x2d: (M, D); alpha, bias: scalar params of shape (1,)."""
    M, D = x2d.shape
    tm = _tile_sublane(M, tm_cap)
    return pl.pallas_call(
        _make_layernorm_kernel(eps, D),
        out_shape=jax.ShapeDtypeStruct((M, D), x2d.dtype),
        grid_spec=pltpu.PrefetchScalarGridSpec(
            num_scalar_prefetch=0,
            grid=(M // tm,),
            in_specs=[
                pl.BlockSpec((tm, D), lambda i: (i, 0)),
                pl.BlockSpec(memory_space=pltpu.MemorySpace.SMEM),
                pl.BlockSpec(memory_space=pltpu.MemorySpace.SMEM),
            ],
            out_specs=pl.BlockSpec((tm, D), lambda i: (i, 0)),
        ),
        compiler_params=pltpu.CompilerParams(dimension_semantics=("parallel",)),
    )(x2d, alpha, bias)


# ---------------------------------------------------------------------------
# Tiled linear kernel: out = [relu](x @ W + b) [+ residual]
# ---------------------------------------------------------------------------
def _linear_body(x_ref, w_ref, b_ref, r_ref, o_ref, acc_ref, relu):
    k = pl.program_id(2)

    @pl.when(k == 0)
    def _():
        acc_ref[...] = jnp.zeros_like(acc_ref)

    acc_ref[...] += jnp.dot(
        x_ref[...], w_ref[...], preferred_element_type=jnp.float32
    )

    @pl.when(k == pl.num_programs(2) - 1)
    def _():
        out = acc_ref[...] + b_ref[...].astype(jnp.float32)
        if relu:
            out = jnp.maximum(out, 0.0)
        if r_ref is not None:
            out = out + r_ref[...].astype(jnp.float32)
        o_ref[...] = out.astype(o_ref.dtype)


def _make_linear_kernel(relu, has_residual):
    if has_residual:
        def kernel(x_ref, w_ref, b_ref, r_ref, o_ref, acc_ref):
            _linear_body(x_ref, w_ref, b_ref, r_ref, o_ref, acc_ref, relu)
    else:
        def kernel(x_ref, w_ref, b_ref, o_ref, acc_ref):
            _linear_body(x_ref, w_ref, b_ref, None, o_ref, acc_ref, relu)
    return kernel


def linear(x2d, w, b, *, residual=None, relu=False,
           tm_cap=256, tn_cap=256, tk_cap=512):
    """x2d: (M, K); w: (K, N) (already transposed to lane-dense layout); b: (N,)."""
    M, K = x2d.shape
    N = w.shape[1]
    tm = _tile_sublane(M, tm_cap)
    tn = _tile_lane(N, tn_cap)
    tk = _tile_lane(K, tk_cap)

    b2d = b.reshape(1, N)
    has_residual = residual is not None

    in_specs = [
        pl.BlockSpec((tm, tk), lambda i, j, k: (i, k)),
        pl.BlockSpec((tk, tn), lambda i, j, k: (k, j)),
        pl.BlockSpec((1, tn), lambda i, j, k: (0, j)),
    ]
    args = [x2d, w, b2d]
    if has_residual:
        in_specs.append(pl.BlockSpec((tm, tn), lambda i, j, k: (i, j)))
        args.append(residual)

    return pl.pallas_call(
        _make_linear_kernel(relu, has_residual),
        out_shape=jax.ShapeDtypeStruct((M, N), x2d.dtype),
        grid_spec=pltpu.PrefetchScalarGridSpec(
            num_scalar_prefetch=0,
            grid=(M // tm, N // tn, K // tk),
            in_specs=in_specs,
            out_specs=pl.BlockSpec((tm, tn), lambda i, j, k: (i, j)),
            scratch_shapes=[pltpu.VMEM((tm, tn), jnp.float32)],
        ),
        compiler_params=pltpu.CompilerParams(
            dimension_semantics=("parallel", "parallel", "arbitrary")
        ),
    )(*args)


# ---------------------------------------------------------------------------
# Scaled-dot-product attention kernel, one (batch, head) per grid step
# ---------------------------------------------------------------------------
def _make_attention_kernel(scale):
    def kernel(q_ref, k_ref, v_ref, m_ref, o_ref):
        q = q_ref[...].astype(jnp.float32)     # (Sq, dk)
        k = k_ref[...].astype(jnp.float32)     # (Sk, dk)
        v = v_ref[...]                         # (Sk, dk)
        # scores = (q @ k^T) / sqrt(d_k)  — contract last dims, no explicit transpose
        scores = lax.dot_general(
            q, k, (((1,), (1,)), ((), ())),
            preferred_element_type=jnp.float32) * scale
        scores = jnp.where(m_ref[...] == 0.0, jnp.float32(-1e9), scores)
        scores = scores - jnp.max(scores, axis=-1, keepdims=True)
        p = jnp.exp(scores)
        p = p / jnp.sum(p, axis=-1, keepdims=True)
        o = jnp.dot(p.astype(v.dtype), v, preferred_element_type=jnp.float32)
        o_ref[...] = o.astype(o_ref.dtype)

    return kernel


def attention(q, k, v, mask):
    """q: (B, H, Sq, dk); k, v: (B, H, Sk, dk); mask: (B, Sq, Sk), 1=keep / 0=mask."""
    B, H, Sq, dk = q.shape
    Sk = k.shape[2]
    scale = 1.0 / math.sqrt(dk)
    return pl.pallas_call(
        _make_attention_kernel(scale),
        out_shape=jax.ShapeDtypeStruct((B, H, Sq, dk), q.dtype),
        grid_spec=pltpu.PrefetchScalarGridSpec(
            num_scalar_prefetch=0,
            grid=(B, H),
            in_specs=[
                pl.BlockSpec((None, None, Sq, dk), lambda b, h: (b, h, 0, 0)),
                pl.BlockSpec((None, None, Sk, dk), lambda b, h: (b, h, 0, 0)),
                pl.BlockSpec((None, None, Sk, dk), lambda b, h: (b, h, 0, 0)),
                pl.BlockSpec((None, Sq, Sk), lambda b, h: (b, 0, 0)),
            ],
            out_specs=pl.BlockSpec((None, None, Sq, dk), lambda b, h: (b, h, 0, 0)),
        ),
        compiler_params=pltpu.CompilerParams(
            dimension_semantics=("parallel", "parallel")
        ),
    )(q, k, v, mask)


# ---------------------------------------------------------------------------
# Multi-head attention (returns concatenated heads, pre-w_o so the caller can
# fuse w_o with the residual add)
# ---------------------------------------------------------------------------
def _mha(q_in, kv_in, mask, p, h):
    B, Sq, D = q_in.shape
    Skv = kv_in.shape[1]
    dk = D // h

    q = linear(q_in.reshape(B * Sq, D), p["wq_t"], p["bq"])
    k = linear(kv_in.reshape(B * Skv, D), p["wk_t"], p["bk"])
    v = linear(kv_in.reshape(B * Skv, D), p["wv_t"], p["bv"])

    q = q.reshape(B, Sq, h, dk).transpose(0, 2, 1, 3)
    k = k.reshape(B, Skv, h, dk).transpose(0, 2, 1, 3)
    v = v.reshape(B, Skv, h, dk).transpose(0, 2, 1, 3)

    # heads share the mask -> squeeze the head axis and broadcast over queries
    m = jnp.broadcast_to(mask[:, 0].astype(jnp.float32), (B, Sq, Skv))

    o = attention(q, k, v, m)                         # (B, H, Sq, dk)
    return o.transpose(0, 2, 1, 3).reshape(B * Sq, D)


# ---------------------------------------------------------------------------
# DecoderBlock forward
# ---------------------------------------------------------------------------
def decoder_block(x, enc_out, src_mask, tgt_mask, params):
    B, S, D = x.shape
    h = params["h"]

    # Pre-transpose nn.Linear weights (out, in) -> (in, out) once per call so the
    # matmul kernels see a lane-dense (K, N) operand.
    def _prep(p):
        return {
            "wq_t": p["wq"].T, "bq": p["bq"],
            "wk_t": p["wk"].T, "bk": p["bk"],
            "wv_t": p["wv"].T, "bv": p["bv"],
            "wo_t": p["wo"].T, "bo": p["bo"],
        }

    p_self = _prep(params["self_attn"])
    p_cross = _prep(params["cross_attn"])
    w1_t = params["ffn"]["w1"].T
    w2_t = params["ffn"]["w2"].T

    x2d = x.reshape(B * S, D)

    # ---- sublayer 1: x = x + self_attn(norm(x), norm(x), norm(x), tgt_mask)
    a1, b1 = params["ln"][0]
    n1 = layernorm(x2d, a1, b1)
    heads = _mha(n1.reshape(B, S, D), n1.reshape(B, S, D), tgt_mask, p_self, h)
    x2d = linear(heads, p_self["wo_t"], p_self["bo"], residual=x2d)

    # ---- sublayer 2: x = x + cross_attn(norm(x), enc_out, enc_out, src_mask)
    a2, b2 = params["ln"][1]
    n2 = layernorm(x2d, a2, b2)
    heads = _mha(n2.reshape(B, S, D), enc_out, src_mask, p_cross, h)
    x2d = linear(heads, p_cross["wo_t"], p_cross["bo"], residual=x2d)

    # ---- sublayer 3: x = x + linear_2(relu(linear_1(norm(x))))
    a3, b3 = params["ln"][2]
    n3 = layernorm(x2d, a3, b3)
    hdn = linear(n3, w1_t, params["ffn"]["b1"], relu=True)
    x2d = linear(hdn, w2_t, params["ffn"]["b2"], residual=x2d)

    return x2d.reshape(B, S, D)


# ---------------------------------------------------------------------------
# Pure-JAX reference (mirrors the PyTorch module, dropout = identity)
# ---------------------------------------------------------------------------
def _reference(x, enc_out, src_mask, tgt_mask, params, eps=1e-6):
    hp = params["h"]

    def ln(v, a, b):
        mean = jnp.mean(v, axis=-1, keepdims=True)
        std = jnp.std(v, axis=-1, keepdims=True, ddof=1)  # torch unbiased std
        return a * (v - mean) / (std + eps) + b

    def lin(v, w, b):
        return jnp.einsum("...d,nd->...n", v, w,
                          precision=lax.Precision.HIGHEST) + b

    def mha(qi, ki, vi, mask, p):
        B, Sq, D = qi.shape
        Skv = ki.shape[1]
        dk = D // hp
        q = lin(qi, p["wq"], p["bq"]).reshape(B, Sq, hp, dk).transpose(0, 2, 1, 3)
        k = lin(ki, p["wk"], p["bk"]).reshape(B, Skv, hp, dk).transpose(0, 2, 1, 3)
        v = lin(vi, p["wv"], p["bv"]).reshape(B, Skv, hp, dk).transpose(0, 2, 1, 3)
        scores = jnp.einsum("bhqd,bhkd->bhqk", q, k,
                            precision=lax.Precision.HIGHEST) / math.sqrt(dk)
        scores = jnp.where(mask == 0, -1e9, scores)
        attn = jax.nn.softmax(scores, axis=-1)
        o = jnp.einsum("bhqk,bhkd->bhqd", attn, v,
                       precision=lax.Precision.HIGHEST)
        o = o.transpose(0, 2, 1, 3).reshape(B, Sq, D)
        return lin(o, p["wo"], p["bo"])

    a1, b1 = params["ln"][0]
    a2, b2 = params["ln"][1]
    a3, b3 = params["ln"][2]
    f = params["ffn"]

    nx = ln(x, a1, b1)
    x = x + mha(nx, nx, nx, tgt_mask, params["self_attn"])
    nx = ln(x, a2, b2)
    x = x + mha(nx, enc_out, enc_out, src_mask, params["cross_attn"])
    nx = ln(x, a3, b3)
    x = x + lin(jnp.maximum(lin(nx, f["w1"], f["b1"]), 0.0), f["w2"], f["b2"])
    return x


# ---------------------------------------------------------------------------
# demo / correctness check
# ---------------------------------------------------------------------------
if __name__ == "__main__":
    batch, seq, enc_seq = 2, 8, 8
    d_model, n_heads, d_ff = 64, 4, 128

    key = jax.random.PRNGKey(0)
    keys = jax.random.split(key, 10)

    def linear_init(k, out_f, in_f):
        kw, kb = jax.random.split(k)
        bound = 1.0 / math.sqrt(in_f)
        w = jax.random.uniform(kw, (out_f, in_f), jnp.float32, -bound, bound)
        b = jax.random.uniform(kb, (out_f,), jnp.float32, -bound, bound)
        return w, b

    def attn_params(k):
        k0, k1, k2, k3 = jax.random.split(k, 4)
        wq, bq = linear_init(k0, d_model, d_model)
        wk, bk = linear_init(k1, d_model, d_model)
        wv, bv = linear_init(k2, d_model, d_model)
        wo, bo = linear_init(k3, d_model, d_model)
        return {"wq": wq, "bq": bq, "wk": wk, "bk": bk,
                "wv": wv, "bv": bv, "wo": wo, "bo": bo}

    def ln_params(k):
        ka, kb = jax.random.split(k)
        alpha = 1.0 + 0.1 * jax.random.normal(ka, (1,), jnp.float32)
        beta = 0.05 * jax.random.normal(kb, (1,), jnp.float32)
        return alpha, beta

    w1, b1_ = linear_init(keys[2], d_ff, d_model)
    w2, b2_ = linear_init(keys[3], d_model, d_ff)

    params = {
        "h": n_heads,
        "self_attn": attn_params(keys[0]),
        "cross_attn": attn_params(keys[1]),
        "ffn": {"w1": w1, "b1": b1_, "w2": w2, "b2": b2_},
        "ln": [ln_params(keys[4]), ln_params(keys[5]), ln_params(keys[6])],
    }

    x = jax.random.normal(keys[7], (batch, seq, d_model), jnp.float32)
    enc_out = jax.random.normal(keys[8], (batch, enc_seq, d_model), jnp.float32)

    # causal target mask (B, 1, S, S); source mask (B, 1, 1, Senc) with one
    # padded key position in batch 1 to exercise the masking path
    tgt_mask = jnp.broadcast_to(
        jnp.tril(jnp.ones((seq, seq), jnp.float32))[None, None],
        (batch, 1, seq, seq))
    src_mask = jnp.ones((batch, 1, 1, enc_seq), jnp.float32)
    src_mask = src_mask.at[1, 0, 0, enc_seq - 1].set(0.0)

    out = decoder_block(x, enc_out, src_mask, tgt_mask, params)
    out = jax.block_until_ready(out)

    ref = _reference(x, enc_out, src_mask, tgt_mask, params)
    assert out.shape == (batch, seq, d_model)
    assert jnp.allclose(out, ref, atol=2e-3, rtol=2e-3), "mismatch vs reference"

    print("KERNEL_OK")
</pallas_src>

<mosaic_0001>
module attributes {stable_mosaic.version = 11 : i64} {
  func.func @kernel(%arg0: i32, %arg1: memref<16x64xf32, #tpu.memory_space<vmem>>, %arg2: memref<1xf32, #tpu.memory_space<smem>>, %arg3: memref<1xf32, #tpu.memory_space<smem>>, %arg4: memref<16x64xf32, #tpu.memory_space<vmem>>) attributes {dimension_semantics = [#tpu.dimension_semantics<parallel>], iteration_bounds = array<i64: 1>, scalar_prefetch = 0 : i64, scratch_operands = 0 : i64, tpu.core_type = #tpu.core_type<tc>, window_params = [{transform_indices = @transform_0, window_bounds = array<i64: 16, 64>}, {transform_indices = @transform_1, window_bounds = array<i64: 1>}, {transform_indices = @transform_2, window_bounds = array<i64: 1>}, {transform_indices = @transform_3, window_bounds = array<i64: 16, 64>}]} {
    %c0 = arith.constant 0 : index
    %c0_0 = arith.constant 0 : index
    %0 = vector.load %arg1[%c0, %c0_0] : memref<16x64xf32, #tpu.memory_space<vmem>>, vector<16x64xf32>
    %cst = arith.constant dense<0.000000e+00> : vector<16xf32>
    %1 = vector.multi_reduction <add>, %0, %cst [1] : vector<16x64xf32> to vector<16xf32>
    %2 = vector.shape_cast %1 : vector<16xf32> to vector<16x1xf32>
    %cst_1 = arith.constant 6.400000e+01 : f32
    %3 = vector.broadcast %cst_1 : f32 to vector<16x1xf32>
    %4 = arith.divf %2, %3 : vector<16x1xf32>
    %5 = vector.broadcast %4 : vector<16x1xf32> to vector<16x64xf32>
    %6 = arith.subf %0, %5 : vector<16x64xf32>
    %7 = arith.mulf %6, %6 : vector<16x64xf32>
    %cst_2 = arith.constant dense<0.000000e+00> : vector<16xf32>
    %8 = vector.multi_reduction <add>, %7, %cst_2 [1] : vector<16x64xf32> to vector<16xf32>
    %9 = vector.shape_cast %8 : vector<16xf32> to vector<16x1xf32>
    %cst_3 = arith.constant 0.0158730168 : f32
    %10 = vector.broadcast %cst_3 : f32 to vector<16x1xf32>
    %11 = arith.mulf %9, %10 : vector<16x1xf32>
    %12 = math.sqrt %11 : vector<16x1xf32>
    %c0_4 = arith.constant 0 : index
    %13 = memref.load %arg2[%c0_4] : memref<1xf32, #tpu.memory_space<smem>>
    %14 = vector.broadcast %13 : f32 to vector<16x64xf32>
    %15 = arith.mulf %14, %6 : vector<16x64xf32>
    %cst_5 = arith.constant 9.99999997E-7 : f32
    %16 = vector.broadcast %cst_5 : f32 to vector<16x1xf32>
    %17 = arith.addf %12, %16 : vector<16x1xf32>
    %18 = vector.broadcast %17 : vector<16x1xf32> to vector<16x64xf32>
    %19 = arith.divf %15, %18 : vector<16x64xf32>
    %c0_6 = arith.constant 0 : index
    %20 = memref.load %arg3[%c0_6] : memref<1xf32, #tpu.memory_space<smem>>
    %21 = vector.broadcast %20 : f32 to vector<16x64xf32>
    %22 = arith.addf %19, %21 : vector<16x64xf32>
    %c0_7 = arith.constant 0 : index
    %c0_8 = arith.constant 0 : index
    %23 = vector.load %arg4[%c0_7, %c0_8] : memref<16x64xf32, #tpu.memory_space<vmem>>, vector<16x64xf32>
    tpu.vector_store %arg4[%c0_7, %c0_8], %22 {strides = array<i32>} : memref<16x64xf32, #tpu.memory_space<vmem>>, vector<16x64xf32>,
    return
  }
  func.func @transform_0(%arg0: i32) -> (i32, i32) {
    %c0_i32 = arith.constant 0 : i32
    %c0_i32_0 = arith.constant 0 : i32
    return %arg0, %c0_i32 : i32, i32
  }
  func.func @transform_1(%arg0: i32) -> i32 {
    %c0_i32 = arith.constant 0 : i32
    %c0_i32_0 = arith.constant 0 : i32
    return %c0_i32 : i32
  }
  func.func @transform_2(%arg0: i32) -> i32 {
    %c0_i32 = arith.constant 0 : i32
    %c0_i32_0 = arith.constant 0 : i32
    return %c0_i32 : i32
  }
  func.func @transform_3(%arg0: i32) -> (i32, i32) {
    %c0_i32 = arith.constant 0 : i32
    %c0_i32_0 = arith.constant 0 : i32
    return %arg0, %c0_i32 : i32, i32
  }
}

</mosaic_0001>

<llo_original>
// kernel: tpu_custom_call.1
$region0: #{tpu_custom_call.1}
  #allocation0 [shape = 'u32[]', space=smem, size = 0x4, offset = 0x4, fixed_abs, tag = 'smem constant byte address 0x4 - core index']
  #allocation1 [shape = 'u32[144,128]{1,0:T(1,128)}', space=vmem, size = 0x12000, scoped, tag = 'internal scratch']
  #allocation2 [shape = 'f32[1]{0:T(128)S(6)}', space=smem, size = 0x200, scoped, tag = 'scoped memory for tpu_custom_call.1']
  #allocation3 [shape = 'f32[1]{0:T(128)S(6)}', space=smem, size = 0x200, scoped, tag = 'scoped memory for tpu_custom_call.1']
  %s0 = inlined_call_operand.hbm [shape: f32[16,64], index: 0, kind: input, shape index: {}]
  %s1 = inlined_call_operand.<no memory space> [shape: f32[1], index: 1, kind: input, shape index: {}]
  %s2 = inlined_call_operand.<no memory space> [shape: f32[1], index: 2, kind: input, shape index: {}]
  %s3 = inlined_call_operand.hbm [shape: f32[16,64], index: 3, kind: output, shape index: {}]
  %s4 = sld [smem:[#allocation0]]
  $region26: #{tpu_custom_call.1} parent=0
    _
  %s6 = ssub.s32 1, %s4
  %s7 = scalar_select 0, %s6, %s4
  %8 = sst [smem:[#allocation2]] %s1
  %9 = sst [smem:[#allocation3]] %s2
  $region1: #{tpu_custom_call.1} parent=0
    #allocation4 [shape = 'u8[8192]{0}', space=vmem, size = 0x2000, scoped, tag = 'input window, operand 0, single buffered']
    #allocation5 [shape = 's32[1]{0}', space=sflag, size = 0x4, scoped, tag = 'scoped memory for tpu_custom_call.1']
    #allocation6 [shape = 's32[1]{0}', space=sflag, size = 0x4, scoped, tag = 'scoped memory for tpu_custom_call.1']
    #allocation7 [shape = 'u8[8192]{0}', space=vmem, size = 0x2000, scoped, tag = 'output window, operand 0, single buffered']
    %10 = vsyncpa [#allocation5], 0
    %11 = vsyncpa [#allocation6], 0
    // Predicated region
    $region2: #{tpu_custom_call.1} parent=1 // pred_check
      _
    $region3: #{tpu_custom_call.1} parent=1 // pred_check_branch
      %13 = sbr.rel (0) target = $region5
    $region4: #{tpu_custom_call.1} parent=1 // pred_region
      %s15 = ssub.s32 256, 256
      %16 = vsyncadd [#allocation5], %s15
      %s17 = sshll.u32 [#allocation4], 4
      %s18 = int_to_ptr.vmem [resolvable:$true] %s17
      %23 = dma.hbm_to_vmem [thread:$0]  %s0, 256, %s18, [#allocation5], 128, 128, 8
    $region5: #{tpu_custom_call.1} parent=1 // pred_fallthru
      _
    // Predicated region
    $region6: #{tpu_custom_call.1} parent=1 // pred_check
      _
    $region7: #{tpu_custom_call.1} parent=1 // pred_check_branch
      %25 = sbr.rel (0) target = $region9
    $region8: #{tpu_custom_call.1} parent=1 // pred_region
      _
    $region9: #{tpu_custom_call.1} parent=1 // pred_fallthru
      _
    // Predicated region
    $region10: #{tpu_custom_call.1} parent=1 // pred_check
      _
    $region11: #{tpu_custom_call.1} parent=1 // pred_check_branch
      %27 = sbr.rel (0) target = $region13
    $region12: #{tpu_custom_call.1} parent=1 // pred_region
      _
    $region13: #{tpu_custom_call.1} parent=1 // pred_fallthru
      _
    // Predicated region
    $region14: #{tpu_custom_call.1} parent=1 // pred_check
      _
    $region15: #{tpu_custom_call.1} parent=1 // pred_check_branch
      %29 = sbr.rel (0) target = $region17
    $region16: #{tpu_custom_call.1} parent=1 // pred_region
      %30 = dma.done [#allocation5], 256
    $region17: #{tpu_custom_call.1} parent=1 // pred_fallthru
      _
    %v31 = vld [vmem:[#allocation4] sm:$0xff]
    %v32 = vld [vmem:[#allocation4 + $0x8] sm:$0xff]
    %vm33 = vcmask 523264
    %v34 = vsel %vm33, %v31, 0.0
    %35 = vadd.xlane.f32.xlu0 %v34
    %v36 = vpop.xlane.xlu0 %35
    %v37 = vsel %vm33, %v32, 0.0
    %38 = vadd.xlane.f32.xlu0 %v37
    %v39 = vpop.xlane.xlu0 %38
    %v40 = vrcp.pop 64.0
    %v41 = vmul.f32 %v36, %v40
    %v42 = vmul.f32 %v39, %v40
    %v43 = vsub.f32 %v31, %v41
    %v44 = vsub.f32 %v32, %v42
    %v45 = vmul.f32 %v43, %v43
    %v46 = vmul.f32 %v44, %v44
    %v47 = vsel %vm33, %v45, 0.0
    %48 = vadd.xlane.f32.xlu0 %v47
    %v49 = vpop.xlane.xlu0 %48
    %v50 = vsel %vm33, %v46, 0.0
    %51 = vadd.xlane.f32.xlu0 %v50
    %v52 = vpop.xlane.xlu0 %51
    %v53 = vmul.f32 %v49, 0.015873017
    %v54 = vmul.f32 %v52, 0.015873017
    %v55 = vrsqrt.pop %v53
    %v56 = vmul.f32 %v53, %v55
    %vm57 = vcmp.eq.f32.partialorder %v53, inf
    %v58 = vsel %vm57, %v53, %v56
    %vm59 = vcmp.eq.f32.partialorder %v53, 0.0
    %v60 = vand.u32 %v53, 2147483648
    %v61 = vsel %vm59, %v60, %v58
    %v62 = vrsqrt.pop %v54
    %v63 = vmul.f32 %v54, %v62
    %vm64 = vcmp.eq.f32.partialorder %v54, inf
    %v65 = vsel %vm64, %v54, %v63
    %vm66 = vcmp.eq.f32.partialorder %v54, 0.0
    %v67 = vand.u32 %v54, 2147483648
    %v68 = vsel %vm66, %v67, %v65
    %s69 = sld [smem:[#allocation2]]
    %v70 = vstv %s69
    %v71 = vmul.f32 %v70, %v43
    %v72 = vmul.f32 %v70, %v44
    %v73 = vadd.f32 %v61, 1e-06
    %v74 = vadd.f32 %v68, 1e-06
    %v75 = vrcp.pop %v73
    %v76 = vmul.f32 %v71, %v75
    %v77 = vrcp.pop %v74
    %v78 = vmul.f32 %v72, %v77
    %s79 = sld [smem:[#allocation3]]
    %v80 = vstv %s79
    %v81 = vadd.f32 %v76, %v80
    %v82 = vadd.f32 %v78, %v80
    %83 = vst.msk [vmem:[#allocation7] sm:$0xff] %vm33, %v81
    %84 = vst.msk [vmem:[#allocation7 + $0x8] sm:$0xff] %vm33, %v82
    // Predicated region
    $region18: #{tpu_custom_call.1} parent=1 // pred_check
      _
    $region19: #{tpu_custom_call.1} parent=1 // pred_check_branch
      %86 = sbr.rel (0) target = $region21
    $region20: #{tpu_custom_call.1} parent=1 // pred_region
      %s88 = ssub.s32 256, 256
      %89 = vsyncadd [#allocation6], %s88
      %s90 = sshll.u32 [#allocation7], 4
      %s91 = int_to_ptr.vmem [resolvable:$true] %s90
      %96 = dma.vmem_to_hbm [thread:$0]  %s91, 256, %s3, [#allocation6], 128, 128, 8
    $region21: #{tpu_custom_call.1} parent=1 // pred_fallthru
      _
    // Predicated region
    $region22: #{tpu_custom_call.1} parent=1 // pred_check
      _
    $region23: #{tpu_custom_call.1} parent=1 // pred_check_branch
      %98 = sbr.rel (0) target = $region25
    $region24: #{tpu_custom_call.1} parent=1 // pred_region
      %99 = dma.done [#allocation6], 256
    $region25: #{tpu_custom_call.1} parent=1 // pred_fallthru
      _
    %100 = vsyncpa [#allocation5], 1
    %101 = vsyncpa [#allocation6], 1

</llo_original>
